<compile_context>
chip_gen: v7x
topology: tpu7x:2x2x1
jax: 0.10.0
libtpu: 0.0.40
codegen_flags: <defaults>
</compile_context>

<pallas_src>
import jax
import jax.numpy as jnp
from jax import lax
from jax.experimental import pallas as pl
from jax.experimental.pallas import tpu as pltpu


def _round_up(x, m):
    return ((x + m - 1) // m) * m


def _autoencoder_kernel(x_ref,
                        w1_ref, b1_ref,   # encoder.fc1_hidden   (hid, in)
                        w2_ref, b2_ref,   # encoder.fc2_hidden   (hid, hid)
                        w3_ref, b3_ref,   # encoder.fc2_botlneck (bot, hid)
                        w4_ref, b4_ref,   # decoder.fc1          (hid, bot)
                        w5_ref, b5_ref,   # decoder.fc2          (in,  hid)
                        out_ref):
    """Fused Encoder+Decoder forward over one batch tile.

    Weights are in PyTorch layout (out, in); the contraction over the last dim
    of both operands computes x @ W.T on the MXU without wrapper transposes.
    Output is one lane-dense slab [encoded | decoded | zero-pad] (width padded
    to a multiple of 128) so the store is unmasked.
    """
    def dense(h, w_ref, b_ref):
        y = lax.dot_general(h, w_ref[...],
                            dimension_numbers=(((1,), (1,)), ((), ())),
                            preferred_element_type=jnp.float32)
        return y + b_ref[...]

    x = x_ref[...].astype(jnp.float32)

    # ---- Encoder ----
    h = jnp.maximum(dense(x, w1_ref, b1_ref), 0.0)   # relu(fc1_hidden)
    h = jnp.maximum(dense(h, w2_ref, b2_ref), 0.0)   # relu(fc2_hidden)
    enc = dense(h, w3_ref, b3_ref)                   # encoded (no activation)

    # ---- Decoder ----  (Dropout(p=0.2) == identity in eval mode)
    d = jnp.maximum(dense(enc, w4_ref, b4_ref), 0.0)  # relu(fc1)
    dec = dense(d, w5_ref, b5_ref)                    # decoded

    tile_b = out_ref.shape[0]
    pad = out_ref.shape[1] - enc.shape[1] - dec.shape[1]
    pieces = [enc, dec]
    if pad > 0:
        pieces.append(jnp.zeros((tile_b, pad), jnp.float32))
    out_ref[...] = jnp.concatenate(pieces, axis=1).astype(out_ref.dtype)


@jax.jit
def model_autoencoder_forward(x, params):
    """x: (batch, input_size) float32. params: dict of (W, b) per layer in
    PyTorch layout (W is (out, in)). Returns (encoded, decoded)."""
    batch, n_input = x.shape
    (w1, b1), (w2, b2), (w3, b3), (w4, b4), (w5, b5) = (
        params["enc_fc1"], params["enc_fc2"], params["enc_bot"],
        params["dec_fc1"], params["dec_fc2"],
    )
    n_hidden = w1.shape[0]
    n_bottleneck = w3.shape[0]

    # Batch tile: multiple of 8 (f32 sublane), capped at 512 rows so tiles +
    # resident weights stay well under the v7x 64 MiB / 32 MiB-scoped VMEM.
    tile_b = min(512, _round_up(batch, 8))
    batch_p = _round_up(batch, tile_b)
    if batch_p != batch:
        x = jnp.pad(x, ((0, batch_p - batch), (0, 0)))
    grid = (batch_p // tile_b,)

    # Lane-dense combined output slab: [encoded | decoded | zeros] padded to 128.
    out_width = _round_up(n_bottleneck + n_input, 128)

    # Biases as (1, out) rows (metadata-only reshape under jit).
    b1r, b2r, b3r, b4r, b5r = (b.reshape(1, -1) for b in (b1, b2, b3, b4, b5))

    def resident(shape):
        # Same block index every grid step => stays VMEM-resident, no re-DMA.
        return pl.BlockSpec(shape, lambda i: (0, 0))

    in_specs = [
        pl.BlockSpec((tile_b, n_input), lambda i: (i, 0)),     # x: batch-tiled
        resident(w1.shape), resident((1, n_hidden)),
        resident(w2.shape), resident((1, n_hidden)),
        resident(w3.shape), resident((1, n_bottleneck)),
        resident(w4.shape), resident((1, n_hidden)),
        resident(w5.shape), resident((1, n_input)),
    ]
    out_specs = pl.BlockSpec((tile_b, out_width), lambda i: (i, 0))

    flops = 2 * batch_p * (n_input * n_hidden + n_hidden * n_hidden
                           + n_hidden * n_bottleneck + n_bottleneck * n_hidden
                           + n_hidden * n_input)
    bytes_accessed = 4 * (batch_p * n_input + batch_p * out_width
                          + sum(int(w.size) + int(b.size) for (w, b) in
                                ((w1, b1), (w2, b2), (w3, b3), (w4, b4), (w5, b5))))

    out = pl.pallas_call(
        _autoencoder_kernel,
        out_shape=jax.ShapeDtypeStruct((batch_p, out_width), jnp.float32),
        grid=grid,
        in_specs=in_specs,
        out_specs=out_specs,
        compiler_params=pltpu.CompilerParams(
            dimension_semantics=("parallel",)),
        cost_estimate=pl.CostEstimate(flops=flops, transcendentals=0,
                                      bytes_accessed=bytes_accessed),
    )(x, w1, b1r, w2, b2r, w3, b3r, w4, b4r, w5, b5r)

    encoded = out[:batch, :n_bottleneck]
    decoded = out[:batch, n_bottleneck:n_bottleneck + n_input]
    return encoded, decoded


def _init_linear(key, n_out, n_in):
    """Deterministic init mimicking nn.Linear default (uniform +- 1/sqrt(fan_in))."""
    kw, kb = jax.random.split(key)
    bound = 1.0 / jnp.sqrt(jnp.float32(n_in))
    w = jax.random.uniform(kw, (n_out, n_in), jnp.float32, -bound, bound)
    b = jax.random.uniform(kb, (n_out,), jnp.float32, -bound, bound)
    return w, b


def _reference_forward(x, params):
    """Pure-JAX reference with identical semantics (eval-mode dropout)."""
    (w1, b1), (w2, b2), (w3, b3), (w4, b4), (w5, b5) = (
        params["enc_fc1"], params["enc_fc2"], params["enc_bot"],
        params["dec_fc1"], params["dec_fc2"],
    )
    h = jnp.maximum(x @ w1.T + b1, 0.0)
    h = jnp.maximum(h @ w2.T + b2, 0.0)
    enc = h @ w3.T + b3
    d = jnp.maximum(enc @ w4.T + b4, 0.0)
    dec = d @ w5.T + b5
    return enc, dec


if __name__ == "__main__":
    # Small shapes consistent with the module: MLP over flat feature vectors.
    batch = 8
    input_size = 64
    n_hidden = 32
    bottleneck_size = 16

    root = jax.random.PRNGKey(0)
    kx, k1, k2, k3, k4, k5 = jax.random.split(root, 6)

    x = jax.random.normal(kx, (batch, input_size), jnp.float32)

    params = {
        "enc_fc1": _init_linear(k1, n_hidden, input_size),       # fc1_hidden
        "enc_fc2": _init_linear(k2, n_hidden, n_hidden),         # fc2_hidden
        "enc_bot": _init_linear(k3, bottleneck_size, n_hidden),  # fc2_botlneck
        "dec_fc1": _init_linear(k4, n_hidden, bottleneck_size),  # decoder.fc1
        "dec_fc2": _init_linear(k5, input_size, n_hidden),       # decoder.fc2
    }

    encoded, decoded = model_autoencoder_forward(x, params)
    jax.block_until_ready((encoded, decoded))

    enc_ref, dec_ref = _reference_forward(x, params)
    assert encoded.shape == (batch, bottleneck_size)
    assert decoded.shape == (batch, input_size)
    assert jnp.allclose(encoded, enc_ref, atol=1e-5, rtol=1e-5)
    assert jnp.allclose(decoded, dec_ref, atol=1e-5, rtol=1e-5)

    print("KERNEL_OK")
</pallas_src>

<mosaic_0001>
module attributes {stable_mosaic.version = 11 : i64} {
  func.func @_autoencoder_kernel(%arg0: i32, %arg1: memref<8x64xf32, #tpu.memory_space<vmem>>, %arg2: memref<32x64xf32, #tpu.memory_space<vmem>>, %arg3: memref<1x32xf32, #tpu.memory_space<vmem>>, %arg4: memref<32x32xf32, #tpu.memory_space<vmem>>, %arg5: memref<1x32xf32, #tpu.memory_space<vmem>>, %arg6: memref<16x32xf32, #tpu.memory_space<vmem>>, %arg7: memref<1x16xf32, #tpu.memory_space<vmem>>, %arg8: memref<32x16xf32, #tpu.memory_space<vmem>>, %arg9: memref<1x32xf32, #tpu.memory_space<vmem>>, %arg10: memref<64x32xf32, #tpu.memory_space<vmem>>, %arg11: memref<1x64xf32, #tpu.memory_space<vmem>>, %arg12: memref<8x128xf32, #tpu.memory_space<vmem>>) attributes {dimension_semantics = [#tpu.dimension_semantics<parallel>], iteration_bounds = array<i64: 1>, scalar_prefetch = 0 : i64, scratch_operands = 0 : i64, tpu.core_type = #tpu.core_type<tc>, window_params = [{transform_indices = @transform_0, window_bounds = array<i64: 8, 64>}, {pipeline_mode = #tpu.pipeline_mode<synchronous>, transform_indices = @transform_1, window_bounds = array<i64: 32, 64>}, {pipeline_mode = #tpu.pipeline_mode<synchronous>, transform_indices = @transform_2, window_bounds = array<i64: 1, 32>}, {pipeline_mode = #tpu.pipeline_mode<synchronous>, transform_indices = @transform_3, window_bounds = array<i64: 32, 32>}, {pipeline_mode = #tpu.pipeline_mode<synchronous>, transform_indices = @transform_4, window_bounds = array<i64: 1, 32>}, {pipeline_mode = #tpu.pipeline_mode<synchronous>, transform_indices = @transform_5, window_bounds = array<i64: 16, 32>}, {pipeline_mode = #tpu.pipeline_mode<synchronous>, transform_indices = @transform_6, window_bounds = array<i64: 1, 16>}, {pipeline_mode = #tpu.pipeline_mode<synchronous>, transform_indices = @transform_7, window_bounds = array<i64: 32, 16>}, {pipeline_mode = #tpu.pipeline_mode<synchronous>, transform_indices = @transform_8, window_bounds = array<i64: 1, 32>}, {pipeline_mode = #tpu.pipeline_mode<synchronous>, transform_indices = @transform_9, window_bounds = array<i64: 64, 32>}, {pipeline_mode = #tpu.pipeline_mode<synchronous>, transform_indices = @transform_10, window_bounds = array<i64: 1, 64>}, {transform_indices = @transform_11, window_bounds = array<i64: 8, 128>}]} {
    %c0 = arith.constant 0 : index
    %c0_0 = arith.constant 0 : index
    %0 = vector.load %arg1[%c0, %c0_0] : memref<8x64xf32, #tpu.memory_space<vmem>>, vector<8x64xf32>
    %c0_1 = arith.constant 0 : index
    %c0_2 = arith.constant 0 : index
    %1 = vector.load %arg2[%c0_1, %c0_2] : memref<32x64xf32, #tpu.memory_space<vmem>>, vector<32x64xf32>
    %cst = arith.constant dense<0.000000e+00> : vector<8x32xf32>
    %2 = tpu.matmul %0, %1, %cst {dimension_numbers = #tpu.dot_dimension_numbers<[1], [1], [0], [0], [0, 0, 1, 0], [], []>} : vector<8x64xf32>, vector<32x64xf32>, vector<8x32xf32> -> vector<8x32xf32>
    %c0_3 = arith.constant 0 : index
    %c0_4 = arith.constant 0 : index
    %3 = vector.load %arg3[%c0_3, %c0_4] : memref<1x32xf32, #tpu.memory_space<vmem>>, vector<1x32xf32>
    %4 = vector.broadcast %3 : vector<1x32xf32> to vector<8x32xf32>
    %5 = arith.addf %2, %4 : vector<8x32xf32>
    %cst_5 = arith.constant 0.000000e+00 : f32
    %6 = vector.broadcast %cst_5 : f32 to vector<8x32xf32>
    %7 = arith.maximumf %5, %6 : vector<8x32xf32>
    %c0_6 = arith.constant 0 : index
    %c0_7 = arith.constant 0 : index
    %8 = vector.load %arg4[%c0_6, %c0_7] : memref<32x32xf32, #tpu.memory_space<vmem>>, vector<32x32xf32>
    %cst_8 = arith.constant dense<0.000000e+00> : vector<8x32xf32>
    %9 = tpu.matmul %7, %8, %cst_8 {dimension_numbers = #tpu.dot_dimension_numbers<[1], [1], [0], [0], [0, 0, 1, 0], [], []>} : vector<8x32xf32>, vector<32x32xf32>, vector<8x32xf32> -> vector<8x32xf32>
    %c0_9 = arith.constant 0 : index
    %c0_10 = arith.constant 0 : index
    %10 = vector.load %arg5[%c0_9, %c0_10] : memref<1x32xf32, #tpu.memory_space<vmem>>, vector<1x32xf32>
    %11 = vector.broadcast %10 : vector<1x32xf32> to vector<8x32xf32>
    %12 = arith.addf %9, %11 : vector<8x32xf32>
    %cst_11 = arith.constant 0.000000e+00 : f32
    %13 = vector.broadcast %cst_11 : f32 to vector<8x32xf32>
    %14 = arith.maximumf %12, %13 : vector<8x32xf32>
    %c0_12 = arith.constant 0 : index
    %c0_13 = arith.constant 0 : index
    %15 = vector.load %arg6[%c0_12, %c0_13] : memref<16x32xf32, #tpu.memory_space<vmem>>, vector<16x32xf32>
    %cst_14 = arith.constant dense<0.000000e+00> : vector<8x16xf32>
    %16 = tpu.matmul %14, %15, %cst_14 {dimension_numbers = #tpu.dot_dimension_numbers<[1], [1], [0], [0], [0, 0, 1, 0], [], []>} : vector<8x32xf32>, vector<16x32xf32>, vector<8x16xf32> -> vector<8x16xf32>
    %c0_15 = arith.constant 0 : index
    %c0_16 = arith.constant 0 : index
    %17 = vector.load %arg7[%c0_15, %c0_16] : memref<1x16xf32, #tpu.memory_space<vmem>>, vector<1x16xf32>
    %18 = vector.broadcast %17 : vector<1x16xf32> to vector<8x16xf32>
    %19 = arith.addf %16, %18 : vector<8x16xf32>
    %c0_17 = arith.constant 0 : index
    %c0_18 = arith.constant 0 : index
    %20 = vector.load %arg8[%c0_17, %c0_18] : memref<32x16xf32, #tpu.memory_space<vmem>>, vector<32x16xf32>
    %cst_19 = arith.constant dense<0.000000e+00> : vector<8x32xf32>
    %21 = tpu.matmul %19, %20, %cst_19 {dimension_numbers = #tpu.dot_dimension_numbers<[1], [1], [0], [0], [0, 0, 1, 0], [], []>} : vector<8x16xf32>, vector<32x16xf32>, vector<8x32xf32> -> vector<8x32xf32>
    %c0_20 = arith.constant 0 : index
    %c0_21 = arith.constant 0 : index
    %22 = vector.load %arg9[%c0_20, %c0_21] : memref<1x32xf32, #tpu.memory_space<vmem>>, vector<1x32xf32>
    %23 = vector.broadcast %22 : vector<1x32xf32> to vector<8x32xf32>
    %24 = arith.addf %21, %23 : vector<8x32xf32>
    %cst_22 = arith.constant 0.000000e+00 : f32
    %25 = vector.broadcast %cst_22 : f32 to vector<8x32xf32>
    %26 = arith.maximumf %24, %25 : vector<8x32xf32>
    %c0_23 = arith.constant 0 : index
    %c0_24 = arith.constant 0 : index
    %27 = vector.load %arg10[%c0_23, %c0_24] : memref<64x32xf32, #tpu.memory_space<vmem>>, vector<64x32xf32>
    %cst_25 = arith.constant dense<0.000000e+00> : vector<8x64xf32>
    %28 = tpu.matmul %26, %27, %cst_25 {dimension_numbers = #tpu.dot_dimension_numbers<[1], [1], [0], [0], [0, 0, 1, 0], [], []>} : vector<8x32xf32>, vector<64x32xf32>, vector<8x64xf32> -> vector<8x64xf32>
    %c0_26 = arith.constant 0 : index
    %c0_27 = arith.constant 0 : index
    %29 = vector.load %arg11[%c0_26, %c0_27] : memref<1x64xf32, #tpu.memory_space<vmem>>, vector<1x64xf32>
    %30 = vector.broadcast %29 : vector<1x64xf32> to vector<8x64xf32>
    %31 = arith.addf %28, %30 : vector<8x64xf32>
    %cst_28 = arith.constant 0.000000e+00 : f32
    %32 = vector.broadcast %cst_28 : f32 to vector<8x48xf32>
    %33 = tpu.concatenate %19, %31, %32 in 1 : vector<8x16xf32>, vector<8x64xf32>, vector<8x48xf32> -> vector<8x128xf32>
    %c0_29 = arith.constant 0 : index
    %c0_30 = arith.constant 0 : index
    %34 = vector.load %arg12[%c0_29, %c0_30] : memref<8x128xf32, #tpu.memory_space<vmem>>, vector<8x128xf32>
    tpu.vector_store %arg12[%c0_29, %c0_30], %33 {strides = array<i32>} : memref<8x128xf32, #tpu.memory_space<vmem>>, vector<8x128xf32>,
    return
  }
  func.func @transform_0(%arg0: i32) -> (i32, i32) {
    %c0_i32 = arith.constant 0 : i32
    %c0_i32_0 = arith.constant 0 : i32
    return %arg0, %c0_i32 : i32, i32
  }
  func.func @transform_1(%arg0: i32) -> (i32, i32) {
    %c0_i32 = arith.constant 0 : i32
    %c0_i32_0 = arith.constant 0 : i32
    %c0_i32_1 = arith.constant 0 : i32
    return %c0_i32, %c0_i32_0 : i32, i32
  }
  func.func @transform_2(%arg0: i32) -> (i32, i32) {
    %c0_i32 = arith.constant 0 : i32
    %c0_i32_0 = arith.constant 0 : i32
    %c0_i32_1 = arith.constant 0 : i32
    return %c0_i32, %c0_i32_0 : i32, i32
  }
  func.func @transform_3(%arg0: i32) -> (i32, i32) {
    %c0_i32 = arith.constant 0 : i32
    %c0_i32_0 = arith.constant 0 : i32
    %c0_i32_1 = arith.constant 0 : i32
    return %c0_i32, %c0_i32_0 : i32, i32
  }
  func.func @transform_4(%arg0: i32) -> (i32, i32) {
    %c0_i32 = arith.constant 0 : i32
    %c0_i32_0 = arith.constant 0 : i32
    %c0_i32_1 = arith.constant 0 : i32
    return %c0_i32, %c0_i32_0 : i32, i32
  }
  func.func @transform_5(%arg0: i32) -> (i32, i32) {
    %c0_i32 = arith.constant 0 : i32
    %c0_i32_0 = arith.constant 0 : i32
    %c0_i32_1 = arith.constant 0 : i32
    return %c0_i32, %c0_i32_0 : i32, i32
  }
  func.func @transform_6(%arg0: i32) -> (i32, i32) {
    %c0_i32 = arith.constant 0 : i32
    %c0_i32_0 = arith.constant 0 : i32
    %c0_i32_1 = arith.constant 0 : i32
    return %c0_i32, %c0_i32_0 : i32, i32
  }
  func.func @transform_7(%arg0: i32) -> (i32, i32) {
    %c0_i32 = arith.constant 0 : i32
    %c0_i32_0 = arith.constant 0 : i32
    %c0_i32_1 = arith.constant 0 : i32
    return %c0_i32, %c0_i32_0 : i32, i32
  }
  func.func @transform_8(%arg0: i32) -> (i32, i32) {
    %c0_i32 = arith.constant 0 : i32
    %c0_i32_0 = arith.constant 0 : i32
    %c0_i32_1 = arith.constant 0 : i32
    return %c0_i32, %c0_i32_0 : i32, i32
  }
  func.func @transform_9(%arg0: i32) -> (i32, i32) {
    %c0_i32 = arith.constant 0 : i32
    %c0_i32_0 = arith.constant 0 : i32
    %c0_i32_1 = arith.constant 0 : i32
    return %c0_i32, %c0_i32_0 : i32, i32
  }
  func.func @transform_10(%arg0: i32) -> (i32, i32) {
    %c0_i32 = arith.constant 0 : i32
    %c0_i32_0 = arith.constant 0 : i32
    %c0_i32_1 = arith.constant 0 : i32
    return %c0_i32, %c0_i32_0 : i32, i32
  }
  func.func @transform_11(%arg0: i32) -> (i32, i32) {
    %c0_i32 = arith.constant 0 : i32
    %c0_i32_0 = arith.constant 0 : i32
    return %arg0, %c0_i32 : i32, i32
  }
}

</mosaic_0001>

<llo_original>
// kernel: model_autoencoder_forward.1
$region0: #{model_autoencoder_forward.1}
  #allocation0 [shape = 'u32[]', space=smem, size = 0x4, offset = 0x4, fixed_abs, tag = 'smem constant byte address 0x4 - core index']
  #allocation1 [shape = 'u32[144,128]{1,0:T(1,128)}', space=vmem, size = 0x12000, scoped, tag = 'internal scratch']
  %s0 = inlined_call_operand.vmem [shape: f32[8,64], index: 0, kind: input, shape index: {}]
  %s1 = inlined_call_operand.vmem [shape: f32[32,64], index: 1, kind: input, shape index: {}]
  %s2 = inlined_call_operand.vmem [shape: f32[1,32], index: 2, kind: input, shape index: {}]
  %s3 = inlined_call_operand.vmem [shape: f32[32,32], index: 3, kind: input, shape index: {}]
  %s4 = inlined_call_operand.vmem [shape: f32[1,32], index: 4, kind: input, shape index: {}]
  %s5 = inlined_call_operand.vmem [shape: f32[16,32], index: 5, kind: input, shape index: {}]
  %s6 = inlined_call_operand.vmem [shape: f32[1,16], index: 6, kind: input, shape index: {}]
  %s7 = inlined_call_operand.vmem [shape: f32[32,16], index: 7, kind: input, shape index: {}]
  %s8 = inlined_call_operand.vmem [shape: f32[1,32], index: 8, kind: input, shape index: {}]
  %s9 = inlined_call_operand.vmem [shape: f32[64,32], index: 9, kind: input, shape index: {}]
  %s10 = inlined_call_operand.vmem [shape: f32[1,64], index: 10, kind: input, shape index: {}]
  %s11 = inlined_call_operand.vmem [shape: f32[8,128], index: 11, kind: output, shape index: {}]
  %s12 = sld [smem:[#allocation0]]
  $region54: #{model_autoencoder_forward.1} parent=0
    _
  %s14 = ssub.s32 1, %s12
  %s15 = scalar_select 0, %s14, %s12
  // Predicated region
  $region2: #{model_autoencoder_forward.1} parent=0 // pred_check
    _
  $region3: #{model_autoencoder_forward.1} parent=0 // pred_check_branch
    %17 = sbr.rel (0) target = $region5
  $region4: #{model_autoencoder_forward.1} parent=0 // pred_region
    _
  $region5: #{model_autoencoder_forward.1} parent=0 // pred_fallthru
    _
  // Predicated region
  $region6: #{model_autoencoder_forward.1} parent=0 // pred_check
    _
  $region7: #{model_autoencoder_forward.1} parent=0 // pred_check_branch
    %19 = sbr.rel (0) target = $region9
  $region8: #{model_autoencoder_forward.1} parent=0 // pred_region
    _
  $region9: #{model_autoencoder_forward.1} parent=0 // pred_fallthru
    _
  // Predicated region
  $region10: #{model_autoencoder_forward.1} parent=0 // pred_check
    _
  $region11: #{model_autoencoder_forward.1} parent=0 // pred_check_branch
    %21 = sbr.rel (0) target = $region13
  $region12: #{model_autoencoder_forward.1} parent=0 // pred_region
    _
  $region13: #{model_autoencoder_forward.1} parent=0 // pred_fallthru
    _
  // Predicated region
  $region14: #{model_autoencoder_forward.1} parent=0 // pred_check
    _
  $region15: #{model_autoencoder_forward.1} parent=0 // pred_check_branch
    %23 = sbr.rel (0) target = $region17
  $region16: #{model_autoencoder_forward.1} parent=0 // pred_region
    _
  $region17: #{model_autoencoder_forward.1} parent=0 // pred_fallthru
    _
  // Predicated region
  $region18: #{model_autoencoder_forward.1} parent=0 // pred_check
    _
  $region19: #{model_autoencoder_forward.1} parent=0 // pred_check_branch
    %25 = sbr.rel (0) target = $region21
  $region20: #{model_autoencoder_forward.1} parent=0 // pred_region
    _
  $region21: #{model_autoencoder_forward.1} parent=0 // pred_fallthru
    _
  // Predicated region
  $region22: #{model_autoencoder_forward.1} parent=0 // pred_check
    _
  $region23: #{model_autoencoder_forward.1} parent=0 // pred_check_branch
    %27 = sbr.rel (0) target = $region25
  $region24: #{model_autoencoder_forward.1} parent=0 // pred_region
    _
  $region25: #{model_autoencoder_forward.1} parent=0 // pred_fallthru
    _
  // Predicated region
  $region26: #{model_autoencoder_forward.1} parent=0 // pred_check
    _
  $region27: #{model_autoencoder_forward.1} parent=0 // pred_check_branch
    %29 = sbr.rel (0) target = $region29
  $region28: #{model_autoencoder_forward.1} parent=0 // pred_region
    _
  $region29: #{model_autoencoder_forward.1} parent=0 // pred_fallthru
    _
  // Predicated region
  $region30: #{model_autoencoder_forward.1} parent=0 // pred_check
    _
  $region31: #{model_autoencoder_forward.1} parent=0 // pred_check_branch
    %31 = sbr.rel (0) target = $region33
  $region32: #{model_autoencoder_forward.1} parent=0 // pred_region
    _
  $region33: #{model_autoencoder_forward.1} parent=0 // pred_fallthru
    _
  // Predicated region
  $region34: #{model_autoencoder_forward.1} parent=0 // pred_check
    _
  $region35: #{model_autoencoder_forward.1} parent=0 // pred_check_branch
    %33 = sbr.rel (0) target = $region37
  $region36: #{model_autoencoder_forward.1} parent=0 // pred_region
    _
  $region37: #{model_autoencoder_forward.1} parent=0 // pred_fallthru
    _
  // Predicated region
  $region38: #{model_autoencoder_forward.1} parent=0 // pred_check
    _
  $region39: #{model_autoencoder_forward.1} parent=0 // pred_check_branch
    %35 = sbr.rel (0) target = $region41
  $region40: #{model_autoencoder_forward.1} parent=0 // pred_region
    _
  $region41: #{model_autoencoder_forward.1} parent=0 // pred_fallthru
    _
  // Predicated region
  $region42: #{model_autoencoder_forward.1} parent=0 // pred_check
    _
  $region43: #{model_autoencoder_forward.1} parent=0 // pred_check_branch
    %37 = sbr.rel (0) target = $region45
  $region44: #{model_autoencoder_forward.1} parent=0 // pred_region
    _
  $region45: #{model_autoencoder_forward.1} parent=0 // pred_fallthru
    _
  %v38 = vld [vmem:[%s0] sm:$0xff]
  %v39 = vld [vmem:[%s1] sm:$0xff]
  %v40 = vld [vmem:[%s1 + $0x8] sm:$0xff]
  %v41 = vld [vmem:[%s1 + $0x10] sm:$0xff]
  %v42 = vld [vmem:[%s1 + $0x18] sm:$0xff]
  %v43 = vld [vmem:[%s2] sm:$0x1]
  %v45 = vlaneseq
  %v46 = vshrl.u32 %v45, 7
  %v47 = vsub.s32 0, %v46
  %v48 = vrot.slane %v43, %v47
  %vm50 = vcmask 523264
  %v52 = vsel %vm50, %v38, 0
  %v55 = vsel %vm50, %v39, 0
  %v58 = vsel %vm50, %v40, 0
  %v61 = vsel %vm50, %v41, 0
  %v64 = vsel %vm50, %v42, 0
  %66 = vmatprep.subr.mxu0 0.0
  %67 = vmatpush1.xpose.msra.mxu0 %v55
  %68 = vmatprep.subr.mxu0 0.0
  %69 = vmatpush1.xpose.msra.mxu0 %v58
  %70 = vmatprep.subr.mxu0 0.0
  %71 = vmatpush1.xpose.msra.mxu0 %v61
  %72 = vmatprep.subr.mxu0 0.0
  %73 = vmatpush1.xpose.msra.mxu0 %v64
  %74 = vmatprep.subr.mxu0 0.0
  %75 = vmatpush1.xpose.msra.mxu0 0.0
  %76 = vmatprep.subr.mxu0 0.0
  %77 = vmatpush1.xpose.msra.mxu0 0.0
  %78 = vmatprep.subr.mxu0 0.0
  %79 = vmatpush1.xpose.msra.mxu0 0.0
  %80 = vmatprep.subr.mxu0 0.0
  %81 = vmatpush1.xpose.msra.mxu0 0.0
  %82 = vmatprep.subr.mxu0 0.0
  %83 = vmatpush1.xpose.msra.mxu0 0.0
  %84 = vmatprep.subr.mxu0 0.0
  %85 = vmatpush1.xpose.msra.mxu0 0.0
  %86 = vmatprep.subr.mxu0 0.0
  %87 = vmatpush1.xpose.msra.mxu0 0.0
  %88 = vmatprep.subr.mxu0 0.0
  %89 = vmatpush1.xpose.msra.mxu0 0.0
  %90 = vmatprep.subr.mxu0 0.0
  %91 = vmatpush1.xpose.msra.mxu0 0.0
  %92 = vmatprep.subr.mxu0 0.0
  %93 = vmatpush1.xpose.msra.mxu0 0.0
  %94 = vmatprep.subr.mxu0 0.0
  %95 = vmatpush1.xpose.msra.mxu0 0.0
  %96 = vmatprep.subr.mxu0 0.0
  %97 = vmatpush1.xpose.msra.mxu0 0.0
  %98 = vmatprep.subr.mxu0 0.0
  %99 = vmatpush1.xpose.msra.mxu0 0.0
  %100 = vmatprep.subr.mxu0 0.0
  %101 = vmatpush1.xpose.msra.mxu0 0.0
  %102 = vmatprep.subr.mxu0 0.0
  %103 = vmatpush1.xpose.msra.mxu0 0.0
  %104 = vmatprep.subr.mxu0 0.0
  %105 = vmatpush1.xpose.msra.mxu0 0.0
  %106 = vmatprep.subr.mxu0 0.0
  %107 = vmatpush1.xpose.msra.mxu0 0.0
  %108 = vmatprep.subr.mxu0 0.0
  %109 = vmatpush1.xpose.msra.mxu0 0.0
  %110 = vmatprep.subr.mxu0 0.0
  %111 = vmatpush1.xpose.msra.mxu0 0.0
  %112 = vmatprep.subr.mxu0 0.0
  %113 = vmatpush1.xpose.msra.mxu0 0.0
  %114 = vmatprep.subr.mxu0 0.0
  %115 = vmatpush1.xpose.msra.mxu0 0.0
  %116 = vmatprep.subr.mxu0 0.0
  %117 = vmatpush1.xpose.msra.mxu0 0.0
  %118 = vmatprep.subr.mxu0 0.0
  %119 = vmatpush1.xpose.msra.mxu0 0.0
  %120 = vmatprep.subr.mxu0 0.0
  %121 = vmatpush1.xpose.msra.mxu0 0.0
  %122 = vmatprep.subr.mxu0 0.0
  %123 = vmatpush1.xpose.msra.mxu0 0.0
  %124 = vmatprep.subr.mxu0 0.0
  %125 = vmatpush1.xpose.msra.mxu0 0.0
  %126 = vmatprep.subr.mxu0 0.0
  %127 = vmatpush1.xpose.msra.mxu0 0.0
  %128 = vmatprep.subr.mxu0 0.0
  %129 = vmatpush1.xpose.msra.mxu0 0.0
  %130 = vmatprep.mubr.f32.mxu0 0.0
  %131 = vmatmul.mubr.f32.gmra.mrb[0].mxu0 %v52
  %v132 = vpop.f32.mrb[0].mxu0
  %v133 = vadd.f32 %v48, %v132
  %v134 = vpop.f32.mrb[0].mxu0
  %135 = vdwg.mxu0
  %v136 = vmax.f32 %v133, 0.0
  %v137 = vld [vmem:[%s3] sm:$0xff]
  %v138 = vld [vmem:[%s3 + $0x8] sm:$0xff]
  %v139 = vld [vmem:[%s3 + $0x10] sm:$0xff]
  %v140 = vld [vmem:[%s3 + $0x18] sm:$0xff]
  %v141 = vld [vmem:[%s4] sm:$0x1]
  %v143 = vlaneseq
  %v144 = vshrl.u32 %v143, 7
  %v145 = vsub.s32 0, %v144
  %v146 = vrot.slane %v141, %v145
  %vm148 = vcmask 261120
  %v150 = vsel %vm148, %v136, 0
  %v153 = vsel %vm148, %v137, 0
  %v156 = vsel %vm148, %v138, 0
  %v159 = vsel %vm148, %v139, 0
  %v162 = vsel %vm148, %v140, 0
  %164 = vmatprep.subr.mxu0 0.0
  %165 = vmatpush1.xpose.msra.mxu0 %v153
  %166 = vmatprep.subr.mxu0 0.0
  %167 = vmatpush1.xpose.msra.mxu0 %v156
  %168 = vmatprep.subr.mxu0 0.0
  %169 = vmatpush1.xpose.msra.mxu0 %v159
  %170 = vmatprep.subr.mxu0 0.0
  %171 = vmatpush1.xpose.msra.mxu0 %v162
  %172 = vmatprep.subr.mxu0 0.0
  %173 = vmatpush1.xpose.msra.mxu0 0.0
  %174 = vmatprep.subr.mxu0 0.0
  %175 = vmatpush1.xpose.msra.mxu0 0.0
  %176 = vmatprep.subr.mxu0 0.0
  %177 = vmatpush1.xpose.msra.mxu0 0.0
  %178 = vmatprep.subr.mxu0 0.0
  %179 = vmatpush1.xpose.msra.mxu0 0.0
  %180 = vmatprep.subr.mxu0 0.0
  %181 = vmatpush1.xpose.msra.mxu0 0.0
  %182 = vmatprep.subr.mxu0 0.0
  %183 = vmatpush1.xpose.msra.mxu0 0.0
  %184 = vmatprep.subr.mxu0 0.0
  %185 = vmatpush1.xpose.msra.mxu0 0.0
  %186 = vmatprep.subr.mxu0 0.0
  %187 = vmatpush1.xpose.msra.mxu0 0.0
  %188 = vmatprep.subr.mxu0 0.0
  %189 = vmatpush1.xpose.msra.mxu0 0.0
  %190 = vmatprep.subr.mxu0 0.0
  %191 = vmatpush1.xpose.msra.mxu0 0.0
  %192 = vmatprep.subr.mxu0 0.0
  %193 = vmatpush1.xpose.msra.mxu0 0.0
  %194 = vmatprep.subr.mxu0 0.0
  %195 = vmatpush1.xpose.msra.mxu0 0.0
  %196 = vmatprep.subr.mxu0 0.0
  %197 = vmatpush1.xpose.msra.mxu0 0.0
  %198 = vmatprep.subr.mxu0 0.0
  %199 = vmatpush1.xpose.msra.mxu0 0.0
  %200 = vmatprep.subr.mxu0 0.0
  %201 = vmatpush1.xpose.msra.mxu0 0.0
  %202 = vmatprep.subr.mxu0 0.0
  %203 = vmatpush1.xpose.msra.mxu0 0.0
  %204 = vmatprep.subr.mxu0 0.0
  %205 = vmatpush1.xpose.msra.mxu0 0.0
  %206 = vmatprep.subr.mxu0 0.0
  %207 = vmatpush1.xpose.msra.mxu0 0.0
  %208 = vmatprep.subr.mxu0 0.0
  %209 = vmatpush1.xpose.msra.mxu0 0.0
  %210 = vmatprep.subr.mxu0 0.0
  %211 = vmatpush1.xpose.msra.mxu0 0.0
  %212 = vmatprep.subr.mxu0 0.0
  %213 = vmatpush1.xpose.msra.mxu0 0.0
  %214 = vmatprep.subr.mxu0 0.0
  %215 = vmatpush1.xpose.msra.mxu0 0.0
  %216 = vmatprep.subr.mxu0 0.0
  %217 = vmatpush1.xpose.msra.mxu0 0.0
  %218 = vmatprep.subr.mxu0 0.0
  %219 = vmatpush1.xpose.msra.mxu0 0.0
  %220 = vmatprep.subr.mxu0 0.0
  %221 = vmatpush1.xpose.msra.mxu0 0.0
  %222 = vmatprep.subr.mxu0 0.0
  %223 = vmatpush1.xpose.msra.mxu0 0.0
  %224 = vmatprep.subr.mxu0 0.0
  %225 = vmatpush1.xpose.msra.mxu0 0.0
  %226 = vmatprep.subr.mxu0 0.0
  %227 = vmatpush1.xpose.msra.mxu0 0.0
  %228 = vmatprep.mubr.f32.mxu0 0.0
  %229 = vmatmul.mubr.f32.gmra.mrb[0].mxu0 %v150
  %v230 = vpop.f32.mrb[0].mxu0
  %v231 = vadd.f32 %v146, %v230
  %v232 = vpop.f32.mrb[0].mxu0
  %233 = vdwg.mxu0
  %v234 = vmax.f32 %v231, 0.0
  %v235 = vld [vmem:[%s5] sm:$0xff]
  %v236 = vld [vmem:[%s5 + $0x8] sm:$0xff]
  %v237 = vld [vmem:[%s6] sm:$0x1]
  %v239 = vlaneseq
  %v240 = vshrl.u32 %v239, 7
  %v241 = vsub.s32 0, %v240
  %v242 = vrot.slane %v237, %v241
  %v245 = vsel %vm148, %v234, 0
  %v248 = vsel %vm148, %v235, 0
  %v251 = vsel %vm148, %v236, 0
  %253 = vmatprep.subr.mxu0 0.0
  %254 = vmatpush1.xpose.msra.mxu0 %v248
  %255 = vmatprep.subr.mxu0 0.0
  %256 = vmatpush1.xpose.msra.mxu0 %v251
  %257 = vmatprep.subr.mxu0 0.0
  %258 = vmatpush1.xpose.msra.mxu0 0.0
  %259 = vmatprep.subr.mxu0 0.0
  %260 = vmatpush1.xpose.msra.mxu0 0.0
  %261 = vmatprep.subr.mxu0 0.0
  %262 = vmatpush1.xpose.msra.mxu0 0.0
  %263 = vmatprep.subr.mxu0 0.0
  %264 = vmatpush1.xpose.msra.mxu0 0.0
  %265 = vmatprep.subr.mxu0 0.0
  %266 = vmatpush1.xpose.msra.mxu0 0.0
  %267 = vmatprep.subr.mxu0 0.0
  %268 = vmatpush1.xpose.msra.mxu0 0.0
  %269 = vmatprep.subr.mxu0 0.0
  %270 = vmatpush1.xpose.msra.mxu0 0.0
  %271 = vmatprep.subr.mxu0 0.0
  %272 = vmatpush1.xpose.msra.mxu0 0.0
  %273 = vmatprep.subr.mxu0 0.0
  %274 = vmatpush1.xpose.msra.mxu0 0.0
  %275 = vmatprep.subr.mxu0 0.0
  %276 = vmatpush1.xpose.msra.mxu0 0.0
  %277 = vmatprep.subr.mxu0 0.0
  %278 = vmatpush1.xpose.msra.mxu0 0.0
  %279 = vmatprep.subr.mxu0 0.0
  %280 = vmatpush1.xpose.msra.mxu0 0.0
  %281 = vmatprep.subr.mxu0 0.0
  %282 = vmatpush1.xpose.msra.mxu0 0.0
  %283 = vmatprep.subr.mxu0 0.0
  %284 = vmatpush1.xpose.msra.mxu0 0.0
  %285 = vmatprep.subr.mxu0 0.0
  %286 = vmatpush1.xpose.msra.mxu0 0.0
  %287 = vmatprep.subr.mxu0 0.0
  %288 = vmatpush1.xpose.msra.mxu0 0.0
  %289 = vmatprep.subr.mxu0 0.0
  %290 = vmatpush1.xpose.msra.mxu0 0.0
  %291 = vmatprep.subr.mxu0 0.0
  %292 = vmatpush1.xpose.msra.mxu0 0.0
  %293 = vmatprep.subr.mxu0 0.0
  %294 = vmatpush1.xpose.msra.mxu0 0.0
  %295 = vmatprep.subr.mxu0 0.0
  %296 = vmatpush1.xpose.msra.mxu0 0.0
  %297 = vmatprep.subr.mxu0 0.0
  %298 = vmatpush1.xpose.msra.mxu0 0.0
  %299 = vmatprep.subr.mxu0 0.0
  %300 = vmatpush1.xpose.msra.mxu0 0.0
  %301 = vmatprep.subr.mxu0 0.0
  %302 = vmatpush1.xpose.msra.mxu0 0.0
  %303 = vmatprep.subr.mxu0 0.0
  %304 = vmatpush1.xpose.msra.mxu0 0.0
  %305 = vmatprep.subr.mxu0 0.0
  %306 = vmatpush1.xpose.msra.mxu0 0.0
  %307 = vmatprep.subr.mxu0 0.0
  %308 = vmatpush1.xpose.msra.mxu0 0.0
  %309 = vmatprep.subr.mxu0 0.0
  %310 = vmatpush1.xpose.msra.mxu0 0.0
  %311 = vmatprep.subr.mxu0 0.0
  %312 = vmatpush1.xpose.msra.mxu0 0.0
  %313 = vmatprep.subr.mxu0 0.0
  %314 = vmatpush1.xpose.msra.mxu0 0.0
  %315 = vmatprep.subr.mxu0 0.0
  %316 = vmatpush1.xpose.msra.mxu0 0.0
  %317 = vmatprep.mubr.f32.mxu0 0.0
  %318 = vmatmul.mubr.f32.gmra.mrb[0].mxu0 %v245
  %v319 = vpop.f32.mrb[0].mxu0
  %v320 = vadd.f32 %v242, %v319
  %v321 = vpop.f32.mrb[0].mxu0
  %322 = vdwg.mxu0
  %v323 = vld [vmem:[%s7] sm:$0xff]
  %v324 = vld [vmem:[%s7 + $0x8] sm:$0xff]
  %v325 = vld [vmem:[%s7 + $0x10] sm:$0xff]
  %v326 = vld [vmem:[%s7 + $0x18] sm:$0xff]
  %v327 = vld [vmem:[%s8] sm:$0x1]
  %v329 = vlaneseq
  %v330 = vshrl.u32 %v329, 7
  %v331 = vsub.s32 0, %v330
  %v332 = vrot.slane %v327, %v331
  %vm334 = vcmask 130048
  %v336 = vsel %vm334, %v320, 0
  %v339 = vsel %vm334, %v323, 0
  %v342 = vsel %vm334, %v324, 0
  %v345 = vsel %vm334, %v325, 0
  %v348 = vsel %vm334, %v326, 0
  %350 = vmatprep.subr.mxu0 0.0
  %351 = vmatpush1.xpose.msra.mxu0 %v339
  %352 = vmatprep.subr.mxu0 0.0
  %353 = vmatpush1.xpose.msra.mxu0 %v342
  %354 = vmatprep.subr.mxu0 0.0
  %355 = vmatpush1.xpose.msra.mxu0 %v345
  %356 = vmatprep.subr.mxu0 0.0
  %357 = vmatpush1.xpose.msra.mxu0 %v348
  %358 = vmatprep.subr.mxu0 0.0
  %359 = vmatpush1.xpose.msra.mxu0 0.0
  %360 = vmatprep.subr.mxu0 0.0
  %361 = vmatpush1.xpose.msra.mxu0 0.0
  %362 = vmatprep.subr.mxu0 0.0
  %363 = vmatpush1.xpose.msra.mxu0 0.0
  %364 = vmatprep.subr.mxu0 0.0
  %365 = vmatpush1.xpose.msra.mxu0 0.0
  %366 = vmatprep.subr.mxu0 0.0
  %367 = vmatpush1.xpose.msra.mxu0 0.0
  %368 = vmatprep.subr.mxu0 0.0
  %369 = vmatpush1.xpose.msra.mxu0 0.0
  %370 = vmatprep.subr.mxu0 0.0
  %371 = vmatpush1.xpose.msra.mxu0 0.0
  %372 = vmatprep.subr.mxu0 0.0
  %373 = vmatpush1.xpose.msra.mxu0 0.0
  %374 = vmatprep.subr.mxu0 0.0
  %375 = vmatpush1.xpose.msra.mxu0 0.0
  %376 = vmatprep.subr.mxu0 0.0
  %377 = vmatpush1.xpose.msra.mxu0 0.0
  %378 = vmatprep.subr.mxu0 0.0
  %379 = vmatpush1.xpose.msra.mxu0 0.0
  %380 = vmatprep.subr.mxu0 0.0
  %381 = vmatpush1.xpose.msra.mxu0 0.0
  %382 = vmatprep.subr.mxu0 0.0
  %383 = vmatpush1.xpose.msra.mxu0 0.0
  %384 = vmatprep.subr.mxu0 0.0
  %385 = vmatpush1.xpose.msra.mxu0 0.0
  %386 = vmatprep.subr.mxu0 0.0
  %387 = vmatpush1.xpose.msra.mxu0 0.0
  %388 = vmatprep.subr.mxu0 0.0
  %389 = vmatpush1.xpose.msra.mxu0 0.0
  %390 = vmatprep.subr.mxu0 0.0
  %391 = vmatpush1.xpose.msra.mxu0 0.0
  %392 = vmatprep.subr.mxu0 0.0
  %393 = vmatpush1.xpose.msra.mxu0 0.0
  %394 = vmatprep.subr.mxu0 0.0
  %395 = vmatpush1.xpose.msra.mxu0 0.0
  %396 = vmatprep.subr.mxu0 0.0
  %397 = vmatpush1.xpose.msra.mxu0 0.0
  %398 = vmatprep.subr.mxu0 0.0
  %399 = vmatpush1.xpose.msra.mxu0 0.0
  %400 = vmatprep.subr.mxu0 0.0
  %401 = vmatpush1.xpose.msra.mxu0 0.0
  %402 = vmatprep.subr.mxu0 0.0
  %403 = vmatpush1.xpose.msra.mxu0 0.0
  %404 = vmatprep.subr.mxu0 0.0
  %405 = vmatpush1.xpose.msra.mxu0 0.0
  %406 = vmatprep.subr.mxu0 0.0
  %407 = vmatpush1.xpose.msra.mxu0 0.0
  %408 = vmatprep.subr.mxu0 0.0
  %409 = vmatpush1.xpose.msra.mxu0 0.0
  %410 = vmatprep.subr.mxu0 0.0
  %411 = vmatpush1.xpose.msra.mxu0 0.0
  %412 = vmatprep.subr.mxu0 0.0
  %413 = vmatpush1.xpose.msra.mxu0 0.0
  %414 = vmatprep.mubr.f32.mxu0 0.0
  %415 = vmatmul.mubr.f32.gmra.mrb[0].mxu0 %v336
  %v416 = vpop.f32.mrb[0].mxu0
  %v417 = vadd.f32 %v332, %v416
  %v418 = vpop.f32.mrb[0].mxu0
  %419 = vdwg.mxu0
  %v420 = vmax.f32 %v417, 0.0
  %v421 = vld [vmem:[%s9] sm:$0xff]
  %v422 = vld [vmem:[%s9 + $0x8] sm:$0xff]
  %v423 = vld [vmem:[%s9 + $0x10] sm:$0xff]
  %v424 = vld [vmem:[%s9 + $0x18] sm:$0xff]
  %v425 = vld [vmem:[%s9 + $0x20] sm:$0xff]
  %v426 = vld [vmem:[%s9 + $0x28] sm:$0xff]
  %v427 = vld [vmem:[%s9 + $0x30] sm:$0xff]
  %v428 = vld [vmem:[%s9 + $0x38] sm:$0xff]
  %v429 = vld [vmem:[%s10] sm:$0x1]
  %v431 = vlaneseq
  %v432 = vshrl.u32 %v431, 7
  %v433 = vsub.s32 0, %v432
  %v434 = vrot.slane %v429, %v433
  %v437 = vsel %vm148, %v420, 0
  %v440 = vsel %vm148, %v421, 0
  %v443 = vsel %vm148, %v422, 0
  %v446 = vsel %vm148, %v423, 0
  %v449 = vsel %vm148, %v424, 0
  %v452 = vsel %vm148, %v425, 0
  %v455 = vsel %vm148, %v426, 0
  %v458 = vsel %vm148, %v427, 0
  %v461 = vsel %vm148, %v428, 0
  %463 = vmatprep.subr.mxu0 0.0
  %464 = vmatpush1.xpose.msra.mxu0 %v440
  %465 = vmatprep.subr.mxu0 0.0
  %466 = vmatpush1.xpose.msra.mxu0 %v443
  %467 = vmatprep.subr.mxu0 0.0
  %468 = vmatpush1.xpose.msra.mxu0 %v446
  %469 = vmatprep.subr.mxu0 0.0
  %470 = vmatpush1.xpose.msra.mxu0 %v449
  %471 = vmatprep.subr.mxu0 0.0
  %472 = vmatpush1.xpose.msra.mxu0 %v452
  %473 = vmatprep.subr.mxu0 0.0
  %474 = vmatpush1.xpose.msra.mxu0 %v455
  %475 = vmatprep.subr.mxu0 0.0
  %476 = vmatpush1.xpose.msra.mxu0 %v458
  %477 = vmatprep.subr.mxu0 0.0
  %478 = vmatpush1.xpose.msra.mxu0 %v461
  %479 = vmatprep.subr.mxu0 0.0
  %480 = vmatpush1.xpose.msra.mxu0 0.0
  %481 = vmatprep.subr.mxu0 0.0
  %482 = vmatpush1.xpose.msra.mxu0 0.0
  %483 = vmatprep.subr.mxu0 0.0
  %484 = vmatpush1.xpose.msra.mxu0 0.0
  %485 = vmatprep.subr.mxu0 0.0
  %486 = vmatpush1.xpose.msra.mxu0 0.0
  %487 = vmatprep.subr.mxu0 0.0
  %488 = vmatpush1.xpose.msra.mxu0 0.0
  %489 = vmatprep.subr.mxu0 0.0
  %490 = vmatpush1.xpose.msra.mxu0 0.0
  %491 = vmatprep.subr.mxu0 0.0
  %492 = vmatpush1.xpose.msra.mxu0 0.0
  %493 = vmatprep.subr.mxu0 0.0
  %494 = vmatpush1.xpose.msra.mxu0 0.0
  %495 = vmatprep.subr.mxu0 0.0
  %496 = vmatpush1.xpose.msra.mxu0 0.0
  %497 = vmatprep.subr.mxu0 0.0
  %498 = vmatpush1.xpose.msra.mxu0 0.0
  %499 = vmatprep.subr.mxu0 0.0
  %500 = vmatpush1.xpose.msra.mxu0 0.0
  %501 = vmatprep.subr.mxu0 0.0
  %502 = vmatpush1.xpose.msra.mxu0 0.0
  %503 = vmatprep.subr.mxu0 0.0
  %504 = vmatpush1.xpose.msra.mxu0 0.0
  %505 = vmatprep.subr.mxu0 0.0
  %506 = vmatpush1.xpose.msra.mxu0 0.0
  %507 = vmatprep.subr.mxu0 0.0
  %508 = vmatpush1.xpose.msra.mxu0 0.0
  %509 = vmatprep.subr.mxu0 0.0
  %510 = vmatpush1.xpose.msra.mxu0 0.0
  %511 = vmatprep.subr.mxu0 0.0
  %512 = vmatpush1.xpose.msra.mxu0 0.0
  %513 = vmatprep.subr.mxu0 0.0
  %514 = vmatpush1.xpose.msra.mxu0 0.0
  %515 = vmatprep.subr.mxu0 0.0
  %516 = vmatpush1.xpose.msra.mxu0 0.0
  %517 = vmatprep.subr.mxu0 0.0
  %518 = vmatpush1.xpose.msra.mxu0 0.0
  %519 = vmatprep.subr.mxu0 0.0
  %520 = vmatpush1.xpose.msra.mxu0 0.0
  %521 = vmatprep.subr.mxu0 0.0
  %522 = vmatpush1.xpose.msra.mxu0 0.0
  %523 = vmatprep.subr.mxu0 0.0
  %524 = vmatpush1.xpose.msra.mxu0 0.0
  %525 = vmatprep.subr.mxu0 0.0
  %526 = vmatpush1.xpose.msra.mxu0 0.0
  %527 = vmatprep.mubr.f32.mxu0 0.0
  %528 = vmatmul.mubr.f32.gmra.mrb[0].mxu0 %v437
  %v529 = vpop.f32.mrb[0].mxu0
  %v530 = vadd.f32 %v434, %v529
  %v531 = vpop.f32.mrb[0].mxu0
  %532 = vdwg.mxu0
  %534 = vrot.lane.b32.xlu0 %v530, 16
  %v535 = vpop.permute.xlu0 %534
  %v537 = vsel %vm334, %v320, %v535
  %vm538 = vcmask 654336
  %v539 = vsel %vm538, %v537, 0.0
  %540 = vst [vmem:[%s11] sm:$0xff] %v539
  // Predicated region
  $region46: #{model_autoencoder_forward.1} parent=0 // pred_check
    _
  $region47: #{model_autoencoder_forward.1} parent=0 // pred_check_branch
    %542 = sbr.rel (0) target = $region49
  $region48: #{model_autoencoder_forward.1} parent=0 // pred_region
    _
  $region49: #{model_autoencoder_forward.1} parent=0 // pred_fallthru
    _
  // Predicated region
  $region50: #{model_autoencoder_forward.1} parent=0 // pred_check
    _
  $region51: #{model_autoencoder_forward.1} parent=0 // pred_check_branch
    %544 = sbr.rel (0) target = $region53
  $region52: #{model_autoencoder_forward.1} parent=0 // pred_region
    _
  $region53: #{model_autoencoder_forward.1} parent=0 // pred_fallthru
    _

</llo_original>
